<compile_context>
chip_gen: v5e
topology: v5e:2x2
jax: 0.10.0
libtpu: 0.0.40
codegen_flags: <defaults>
</compile_context>

<pallas_src>
import functools
import math

import jax
import jax.numpy as jnp
from jax.experimental import pallas as pl
from jax.experimental.pallas import tpu as pltpu


def _round_up(x: int, m: int) -> int:
    return ((x + m - 1) // m) * m


def _choose_batch_tile(M: int, compute_dtype):
    """Batch tiling: big lane/sublane-aligned tiles, >=2 tiles when batch is big
    enough so the v7x 'parallel' grid axis splits across both TensorCores."""
    cap = 512 if jnp.dtype(compute_dtype).itemsize >= 4 else 1024
    M8 = _round_up(max(M, 8), 8)
    n_tiles = -(-M8 // cap)                     # ceil
    if n_tiles < 2 and M8 >= 128:               # enough rows to feed 2 cores
        n_tiles = 2
    TM = _round_up(-(-M8 // n_tiles), 8)
    return TM, TM * n_tiles


def _resident_spec(shape, buffered):
    """BlockSpec for a grid-invariant (resident) parameter."""
    idx_map = lambda i: (0,) * len(shape)
    if buffered:
        # Constant index_map -> double-buffering only wastes VMEM.
        return pl.BlockSpec(shape, idx_map, pipeline_mode=pl.Buffered(1))
    return pl.BlockSpec(shape, idx_map)


def _mlp_kernel(*refs, n_layers, has_head, out_w, compute_dtype):
    # refs layout: x, w_0..w_{L-1}, b_0..b_{L-1}, [w_head, b_head], out
    x_ref = refs[0]
    w_refs = refs[1:1 + n_layers]
    b_refs = refs[1 + n_layers:1 + 2 * n_layers]
    idx = 1 + 2 * n_layers
    if has_head:
        wh_ref, bh_ref = refs[idx], refs[idx + 1]
        idx += 2
    o_ref = refs[idx]

    h = x_ref[...]                                    # compute_dtype activations
    act = None
    for l in range(n_layers):                         # static unroll (L is small)
        acc = jnp.dot(h, w_refs[l][...],
                      preferred_element_type=jnp.float32)   # MXU, f32 accumulate
        act = jnp.maximum(acc + b_refs[l][...], 0.0)  # f32 bias + ReLU (v5e-safe)
        h = act.astype(compute_dtype)                 # next matmul input
    if has_head:
        out = jnp.dot(h, wh_ref[...],
                      preferred_element_type=jnp.float32) + bh_ref[...]
    else:
        out = act[:, :out_w]                          # drop padded hidden lanes
    o_ref[...] = out.astype(o_ref.dtype)


def fused_mlp_forward(x, w_list, b_list, w_head, b_head, *,
                      compute_dtype, out_w, logical_sizes):
    """Run the whole MLP in one pallas_call. Returns (M, out_w)."""
    M, K = x.shape
    L = len(w_list)
    assert L >= 1
    Kp0 = w_list[0].shape[0]
    has_head = w_head is not None
    out_dtype = x.dtype

    TM, Mp = _choose_batch_tile(M, compute_dtype)

    # Zero-pad rows to Mp, features to Kp0 (zeros contribute nothing).
    x_pad = jnp.zeros((Mp, Kp0), compute_dtype).at[:M, :K].set(
        x.astype(compute_dtype))

    args = [x_pad] + list(w_list) + list(b_list)
    if has_head:
        args += [w_head, b_head]

    kernel = functools.partial(_mlp_kernel, n_layers=L, has_head=has_head,
                               out_w=out_w, compute_dtype=compute_dtype)

    # VMEM budget from real residency (params + pipelined IO + activations),
    # clamped to v7x physical VMEM per core.
    param_bytes = sum(int(a.size) * a.dtype.itemsize for a in args[1:])
    max_w = max([Kp0] + [w.shape[1] for w in w_list])
    io_bytes = 2 * (TM * Kp0 * x_pad.dtype.itemsize + TM * out_w * jnp.dtype(out_dtype).itemsize)
    act_bytes = 3 * TM * max_w * 4
    vmem_est = 2 * param_bytes + io_bytes + act_bytes
    vmem_limit = int(min(64 << 20, max(2 * vmem_est, 16 << 20)))

    # Cost estimate from unpadded logical sizes (advisory only).
    dims = list(logical_sizes)
    flops = 2 * M * sum(dims[i] * dims[i + 1] for i in range(len(dims) - 1))
    w_itemsize = jnp.dtype(compute_dtype).itemsize
    bytes_accessed = (M * dims[0] * x.dtype.itemsize
                      + sum(dims[i] * dims[i + 1] * w_itemsize + dims[i + 1] * 4
                            for i in range(len(dims) - 1))
                      + M * out_w * jnp.dtype(out_dtype).itemsize)
    cost = pl.CostEstimate(flops=int(flops), transcendentals=0,
                           bytes_accessed=int(bytes_accessed))

    def run(buffered):
        in_specs = [pl.BlockSpec((TM, Kp0), lambda i: (i, 0))]      # batch-tiled
        in_specs += [_resident_spec(a.shape, buffered) for a in args[1:]]
        return pl.pallas_call(
            kernel,
            out_shape=jax.ShapeDtypeStruct((Mp, out_w), out_dtype),
            grid=(Mp // TM,),
            in_specs=in_specs,
            out_specs=pl.BlockSpec((TM, out_w), lambda i: (i, 0)),  # narrow store
            compiler_params=pltpu.CompilerParams(
                dimension_semantics=("parallel",),
                vmem_limit_bytes=vmem_limit),
            cost_estimate=cost,
        )(*args)

    try:
        out = run(True)
    except Exception:
        # Fallback if this jax build rejects pipeline_mode=pl.Buffered(1).
        out = run(False)
    return out[:M]


def xavier_uniform(key, in_features, out_features, dtype=jnp.float32):
    # torch.nn.init.xavier_uniform_: bound = sqrt(6 / (fan_in + fan_out))
    bound = math.sqrt(6.0 / (in_features + out_features))
    return jax.random.uniform(key, (in_features, out_features), dtype=dtype,
                              minval=-bound, maxval=bound)


class MultiLayerPerceptronPallas:
    """JAX/Pallas equivalent of rlberry MultiLayerPerceptron
    (activation_type='RELU', reset_type='XAVIER', zero biases)."""

    def __init__(self, key, in_size, layer_sizes=None, reshape=True,
                 out_size=None, param_dtype=jnp.float32,
                 compute_dtype=jnp.float32):
        self.reshape = reshape
        self.layer_sizes = list(layer_sizes) if layer_sizes else [64, 64]
        self.out_size = out_size
        self.in_size = in_size
        self.compute_dtype = compute_dtype

        sizes = [in_size] + self.layer_sizes
        L = len(sizes) - 1
        n_keys = L + (1 if out_size else 0)
        keys = jax.random.split(key, n_keys)

        # Unpadded f32 parameters (source of truth / reference).
        self.weights = [xavier_uniform(keys[i], sizes[i], sizes[i + 1], param_dtype)
                        for i in range(L)]
        self.biases = [jnp.zeros((sizes[i + 1],), param_dtype) for i in range(L)]
        if out_size:
            self.w_pred = xavier_uniform(keys[-1], sizes[-1], out_size, param_dtype)
            self.b_pred = jnp.zeros((out_size,), param_dtype)

        # Per-layer padded parameters for the fused kernel:
        #   K_l -> previous layer's padded width, N_l -> multiple of 128.
        Kp0 = _round_up(in_size, 128)
        Np = [_round_up(n, 128) for n in self.layer_sizes]
        self._Kp0 = Kp0
        self.w_pad, self.b_pad = [], []
        prev = Kp0
        for l in range(L):
            w = jnp.zeros((prev, Np[l]), compute_dtype).at[
                :sizes[l], :sizes[l + 1]].set(self.weights[l].astype(compute_dtype))
            b = jnp.zeros((1, Np[l]), jnp.float32).at[
                0, :sizes[l + 1]].set(self.biases[l].astype(jnp.float32))
            self.w_pad.append(w)
            self.b_pad.append(b)
            prev = Np[l]

        if out_size:
            # Head kept narrow in N: the kernel stores exactly out_size columns.
            self.w_head = jnp.zeros((prev, out_size), compute_dtype).at[
                :sizes[-1], :].set(self.w_pred.astype(compute_dtype))
            self.b_head = self.b_pred.astype(jnp.float32).reshape(1, out_size)
            self._out_w = out_size
            self._logical = sizes + [out_size]
        else:
            self.w_head = None
            self.b_head = None
            self._out_w = self.layer_sizes[-1]
            self._logical = sizes

    def __call__(self, x):
        if self.reshape:
            x = x.reshape(x.shape[0], -1)
        return fused_mlp_forward(x, self.w_pad, self.b_pad,
                                 self.w_head, self.b_head,
                                 compute_dtype=self.compute_dtype,
                                 out_w=self._out_w,
                                 logical_sizes=self._logical)

    # Pure-JAX reference for correctness checks.
    def reference(self, x):
        if self.reshape:
            x = x.reshape(x.shape[0], -1)
        for w, b in zip(self.weights, self.biases):
            x = jnp.maximum(x @ w + b, 0.0)
        if self.out_size:
            x = x @ self.w_pred + self.b_pred
        return x


if __name__ == "__main__":
    key = jax.random.PRNGKey(0)
    k_x, k_x2, k_params, k_params2 = jax.random.split(key, 4)

    # Small example: batch=2, input of shape (4, 16) flattened to in_size=64.
    x = jax.random.normal(k_x, (2, 4, 16), dtype=jnp.float32)
    in_size = 4 * 16

    model = MultiLayerPerceptronPallas(
        k_params, in_size=in_size, layer_sizes=[64, 64],
        reshape=True, out_size=8)

    out = jax.block_until_ready(model(x))
    ref = model.reference(x)
    assert out.shape == (2, 8), out.shape
    assert jnp.allclose(out, ref, atol=1e-4, rtol=1e-4), "f32 mismatch vs reference"

    # Larger batch: exercises the M-tiled parallel grid (2 balanced tiles).
    x_big = jax.random.normal(k_x2, (300, 4, 16), dtype=jnp.float32)
    out_big = jax.block_until_ready(model(x_big))
    ref_big = model.reference(x_big)
    assert out_big.shape == (300, 8), out_big.shape
    assert jnp.allclose(out_big, ref_big, atol=1e-4, rtol=1e-4), "batched mismatch"

    # bf16 path (all TPU gens): bf16 activation DMA + bf16 matmul inputs,
    # f32 accumulate + f32 bias/ReLU epilogue.
    model_bf16 = MultiLayerPerceptronPallas(
        k_params, in_size=in_size, layer_sizes=[64, 64],
        reshape=True, out_size=8, compute_dtype=jnp.bfloat16)
    out_bf16 = jax.block_until_ready(model_bf16(x))
    assert out_bf16.shape == (2, 8)
    assert jnp.allclose(out_bf16, ref, atol=1e-1, rtol=5e-2), "bf16 mismatch"

    # No-prediction-head variant (out = last hidden activation).
    model_nohead = MultiLayerPerceptronPallas(
        k_params2, in_size=in_size, layer_sizes=[32],
        reshape=True, out_size=None)
    out_nh = jax.block_until_ready(model_nohead(x))
    ref_nh = model_nohead.reference(x)
    assert out_nh.shape == (2, 32), out_nh.shape
    assert jnp.allclose(out_nh, ref_nh, atol=1e-4, rtol=1e-4), "no-head mismatch"

    print("KERNEL_OK")
</pallas_src>

<mosaic_0001>
module attributes {stable_mosaic.version = 11 : i64} {
  func.func @_mlp_kernel(%arg0: i32, %arg1: memref<8x128xf32, #tpu.memory_space<vmem>>, %arg2: memref<128x128xf32, #tpu.memory_space<vmem>>, %arg3: memref<128x128xf32, #tpu.memory_space<vmem>>, %arg4: memref<1x128xf32, #tpu.memory_space<vmem>>, %arg5: memref<1x128xf32, #tpu.memory_space<vmem>>, %arg6: memref<128x8xf32, #tpu.memory_space<vmem>>, %arg7: memref<1x8xf32, #tpu.memory_space<vmem>>, %arg8: memref<8x8xf32, #tpu.memory_space<vmem>>) attributes {dimension_semantics = [#tpu.dimension_semantics<parallel>], iteration_bounds = array<i64: 1>, scalar_prefetch = 0 : i64, scratch_operands = 0 : i64, tpu.core_type = #tpu.core_type<tc>, window_params = [{transform_indices = @transform_0, window_bounds = array<i64: 8, 128>}, {pipeline_mode = #tpu.pipeline_mode<synchronous>, transform_indices = @transform_1, window_bounds = array<i64: 128, 128>}, {pipeline_mode = #tpu.pipeline_mode<synchronous>, transform_indices = @transform_2, window_bounds = array<i64: 128, 128>}, {pipeline_mode = #tpu.pipeline_mode<synchronous>, transform_indices = @transform_3, window_bounds = array<i64: 1, 128>}, {pipeline_mode = #tpu.pipeline_mode<synchronous>, transform_indices = @transform_4, window_bounds = array<i64: 1, 128>}, {pipeline_mode = #tpu.pipeline_mode<synchronous>, transform_indices = @transform_5, window_bounds = array<i64: 128, 8>}, {pipeline_mode = #tpu.pipeline_mode<synchronous>, transform_indices = @transform_6, window_bounds = array<i64: 1, 8>}, {transform_indices = @transform_7, window_bounds = array<i64: 8, 8>}]} {
    %c0 = arith.constant 0 : index
    %c0_0 = arith.constant 0 : index
    %0 = vector.load %arg1[%c0, %c0_0] : memref<8x128xf32, #tpu.memory_space<vmem>>, vector<8x128xf32>
    %c0_1 = arith.constant 0 : index
    %c0_2 = arith.constant 0 : index
    %1 = vector.load %arg2[%c0_1, %c0_2] : memref<128x128xf32, #tpu.memory_space<vmem>>, vector<128x128xf32>
    %cst = arith.constant dense<0.000000e+00> : vector<8x128xf32>
    %2 = tpu.matmul %0, %1, %cst {dimension_numbers = #tpu.dot_dimension_numbers<[1], [0], [0], [1], [0, 0, 1, 1], [], []>} : vector<8x128xf32>, vector<128x128xf32>, vector<8x128xf32> -> vector<8x128xf32>
    %c0_3 = arith.constant 0 : index
    %c0_4 = arith.constant 0 : index
    %3 = vector.load %arg4[%c0_3, %c0_4] : memref<1x128xf32, #tpu.memory_space<vmem>>, vector<1x128xf32>
    %4 = vector.broadcast %3 : vector<1x128xf32> to vector<8x128xf32>
    %5 = arith.addf %2, %4 : vector<8x128xf32>
    %cst_5 = arith.constant 0.000000e+00 : f32
    %6 = vector.broadcast %cst_5 : f32 to vector<8x128xf32>
    %7 = arith.maximumf %5, %6 : vector<8x128xf32>
    %c0_6 = arith.constant 0 : index
    %c0_7 = arith.constant 0 : index
    %8 = vector.load %arg3[%c0_6, %c0_7] : memref<128x128xf32, #tpu.memory_space<vmem>>, vector<128x128xf32>
    %cst_8 = arith.constant dense<0.000000e+00> : vector<8x128xf32>
    %9 = tpu.matmul %7, %8, %cst_8 {dimension_numbers = #tpu.dot_dimension_numbers<[1], [0], [0], [1], [0, 0, 1, 1], [], []>} : vector<8x128xf32>, vector<128x128xf32>, vector<8x128xf32> -> vector<8x128xf32>
    %c0_9 = arith.constant 0 : index
    %c0_10 = arith.constant 0 : index
    %10 = vector.load %arg5[%c0_9, %c0_10] : memref<1x128xf32, #tpu.memory_space<vmem>>, vector<1x128xf32>
    %11 = vector.broadcast %10 : vector<1x128xf32> to vector<8x128xf32>
    %12 = arith.addf %9, %11 : vector<8x128xf32>
    %cst_11 = arith.constant 0.000000e+00 : f32
    %13 = vector.broadcast %cst_11 : f32 to vector<8x128xf32>
    %14 = arith.maximumf %12, %13 : vector<8x128xf32>
    %c0_12 = arith.constant 0 : index
    %c0_13 = arith.constant 0 : index
    %15 = vector.load %arg6[%c0_12, %c0_13] : memref<128x8xf32, #tpu.memory_space<vmem>>, vector<128x8xf32>
    %cst_14 = arith.constant dense<0.000000e+00> : vector<8x8xf32>
    %16 = tpu.matmul %14, %15, %cst_14 {dimension_numbers = #tpu.dot_dimension_numbers<[1], [0], [0], [1], [0, 0, 1, 1], [], []>} : vector<8x128xf32>, vector<128x8xf32>, vector<8x8xf32> -> vector<8x8xf32>
    %c0_15 = arith.constant 0 : index
    %c0_16 = arith.constant 0 : index
    %17 = vector.load %arg7[%c0_15, %c0_16] : memref<1x8xf32, #tpu.memory_space<vmem>>, vector<1x8xf32>
    %18 = vector.broadcast %17 : vector<1x8xf32> to vector<8x8xf32>
    %19 = arith.addf %16, %18 : vector<8x8xf32>
    %c0_17 = arith.constant 0 : index
    %c0_18 = arith.constant 0 : index
    %20 = vector.load %arg8[%c0_17, %c0_18] : memref<8x8xf32, #tpu.memory_space<vmem>>, vector<8x8xf32>
    tpu.vector_store %arg8[%c0_17, %c0_18], %19 {strides = array<i32>} : memref<8x8xf32, #tpu.memory_space<vmem>>, vector<8x8xf32>,
    return
  }
  func.func @transform_0(%arg0: i32) -> (i32, i32) {
    %c0_i32 = arith.constant 0 : i32
    %c0_i32_0 = arith.constant 0 : i32
    return %arg0, %c0_i32 : i32, i32
  }
  func.func @transform_1(%arg0: i32) -> (i32, i32) {
    %c0_i32 = arith.constant 0 : i32
    %c0_i32_0 = arith.constant 0 : i32
    %c0_i32_1 = arith.constant 0 : i32
    return %c0_i32, %c0_i32_0 : i32, i32
  }
  func.func @transform_2(%arg0: i32) -> (i32, i32) {
    %c0_i32 = arith.constant 0 : i32
    %c0_i32_0 = arith.constant 0 : i32
    %c0_i32_1 = arith.constant 0 : i32
    return %c0_i32, %c0_i32_0 : i32, i32
  }
  func.func @transform_3(%arg0: i32) -> (i32, i32) {
    %c0_i32 = arith.constant 0 : i32
    %c0_i32_0 = arith.constant 0 : i32
    %c0_i32_1 = arith.constant 0 : i32
    return %c0_i32, %c0_i32_0 : i32, i32
  }
  func.func @transform_4(%arg0: i32) -> (i32, i32) {
    %c0_i32 = arith.constant 0 : i32
    %c0_i32_0 = arith.constant 0 : i32
    %c0_i32_1 = arith.constant 0 : i32
    return %c0_i32, %c0_i32_0 : i32, i32
  }
  func.func @transform_5(%arg0: i32) -> (i32, i32) {
    %c0_i32 = arith.constant 0 : i32
    %c0_i32_0 = arith.constant 0 : i32
    %c0_i32_1 = arith.constant 0 : i32
    return %c0_i32, %c0_i32_0 : i32, i32
  }
  func.func @transform_6(%arg0: i32) -> (i32, i32) {
    %c0_i32 = arith.constant 0 : i32
    %c0_i32_0 = arith.constant 0 : i32
    %c0_i32_1 = arith.constant 0 : i32
    return %c0_i32, %c0_i32_0 : i32, i32
  }
  func.func @transform_7(%arg0: i32) -> (i32, i32) {
    %c0_i32 = arith.constant 0 : i32
    %c0_i32_0 = arith.constant 0 : i32
    return %arg0, %c0_i32 : i32, i32
  }
}

module attributes {stable_mosaic.version = 11 : i64} {
  func.func @_mlp_kernel(%arg0: i32, %arg1: memref<8x128xf32, #tpu.memory_space<vmem>>, %arg2: memref<128x128xf32, #tpu.memory_space<vmem>>, %arg3: memref<128x128xf32, #tpu.memory_space<vmem>>, %arg4: memref<1x128xf32, #tpu.memory_space<vmem>>, %arg5: memref<1x128xf32, #tpu.memory_space<vmem>>, %arg6: memref<128x8xf32, #tpu.memory_space<vmem>>, %arg7: memref<1x8xf32, #tpu.memory_space<vmem>>, %arg8: memref<8x8xf32, #tpu.memory_space<vmem>>) attributes {dimension_semantics = [#tpu.dimension_semantics<parallel>], iteration_bounds = array<i64: 1>, scalar_prefetch = 0 : i64, scratch_operands = 0 : i64, tpu.core_type = #tpu.core_type<tc>, window_params = [{transform_indices = @transform_0, window_bounds = array<i64: 8, 128>}, {pipeline_mode = #tpu.pipeline_mode<synchronous>, transform_indices = @transform_1, window_bounds = array<i64: 128, 128>}, {pipeline_mode = #tpu.pipeline_mode<synchronous>, transform_indices = @transform_2, window_bounds = array<i64: 128, 128>}, {pipeline_mode = #tpu.pipeline_mode<synchronous>, transform_indices = @transform_3, window_bounds = array<i64: 1, 128>}, {pipeline_mode = #tpu.pipeline_mode<synchronous>, transform_indices = @transform_4, window_bounds = array<i64: 1, 128>}, {pipeline_mode = #tpu.pipeline_mode<synchronous>, transform_indices = @transform_5, window_bounds = array<i64: 128, 8>}, {pipeline_mode = #tpu.pipeline_mode<synchronous>, transform_indices = @transform_6, window_bounds = array<i64: 1, 8>}, {transform_indices = @transform_7, window_bounds = array<i64: 8, 8>}]} {
    %c0 = arith.constant 0 : index
    %c0_0 = arith.constant 0 : index
    %0 = vector.load %arg1[%c0, %c0_0] : memref<8x128xf32, #tpu.memory_space<vmem>>, vector<8x128xf32>
    %c0_1 = arith.constant 0 : index
    %c0_2 = arith.constant 0 : index
    %1 = vector.load %arg2[%c0_1, %c0_2] : memref<128x128xf32, #tpu.memory_space<vmem>>, vector<128x128xf32>
    %cst = arith.constant dense<0.000000e+00> : vector<8x128xf32>
    %2 = tpu.matmul %0, %1, %cst {dimension_numbers = #tpu.dot_dimension_numbers<[1], [0], [0], [1], [0, 0, 1, 1], [], []>} : vector<8x128xf32>, vector<128x128xf32>, vector<8x128xf32> -> vector<8x128xf32>
    %c0_3 = arith.constant 0 : index
    %c0_4 = arith.constant 0 : index
    %3 = vector.load %arg4[%c0_3, %c0_4] : memref<1x128xf32, #tpu.memory_space<vmem>>, vector<1x128xf32>
    %4 = vector.broadcast %3 : vector<1x128xf32> to vector<8x128xf32>
    %5 = arith.addf %2, %4 : vector<8x128xf32>
    %cst_5 = arith.constant 0.000000e+00 : f32
    %6 = vector.broadcast %cst_5 : f32 to vector<8x128xf32>
    %7 = arith.maximumf %5, %6 : vector<8x128xf32>
    %c0_6 = arith.constant 0 : index
    %c0_7 = arith.constant 0 : index
    %8 = vector.load %arg3[%c0_6, %c0_7] : memref<128x128xf32, #tpu.memory_space<vmem>>, vector<128x128xf32>
    %cst_8 = arith.constant dense<0.000000e+00> : vector<8x128xf32>
    %9 = tpu.matmul %7, %8, %cst_8 {dimension_numbers = #tpu.dot_dimension_numbers<[1], [0], [0], [1], [0, 0, 1, 1], [], []>} : vector<8x128xf32>, vector<128x128xf32>, vector<8x128xf32> -> vector<8x128xf32>
    %c0_9 = arith.constant 0 : index
    %c0_10 = arith.constant 0 : index
    %10 = vector.load %arg5[%c0_9, %c0_10] : memref<1x128xf32, #tpu.memory_space<vmem>>, vector<1x128xf32>
    %11 = vector.broadcast %10 : vector<1x128xf32> to vector<8x128xf32>
    %12 = arith.addf %9, %11 : vector<8x128xf32>
    %cst_11 = arith.constant 0.000000e+00 : f32
    %13 = vector.broadcast %cst_11 : f32 to vector<8x128xf32>
    %14 = arith.maximumf %12, %13 : vector<8x128xf32>
    %c0_12 = arith.constant 0 : index
    %c0_13 = arith.constant 0 : index
    %15 = vector.load %arg6[%c0_12, %c0_13] : memref<128x8xf32, #tpu.memory_space<vmem>>, vector<128x8xf32>
    %cst_14 = arith.constant dense<0.000000e+00> : vector<8x8xf32>
    %16 = tpu.matmul %14, %15, %cst_14 {dimension_numbers = #tpu.dot_dimension_numbers<[1], [0], [0], [1], [0, 0, 1, 1], [], []>} : vector<8x128xf32>, vector<128x8xf32>, vector<8x8xf32> -> vector<8x8xf32>
    %c0_15 = arith.constant 0 : index
    %c0_16 = arith.constant 0 : index
    %17 = vector.load %arg7[%c0_15, %c0_16] : memref<1x8xf32, #tpu.memory_space<vmem>>, vector<1x8xf32>
    %18 = vector.broadcast %17 : vector<1x8xf32> to vector<8x8xf32>
    %19 = arith.addf %16, %18 : vector<8x8xf32>
    %c0_17 = arith.constant 0 : index
    %c0_18 = arith.constant 0 : index
    %20 = vector.load %arg8[%c0_17, %c0_18] : memref<8x8xf32, #tpu.memory_space<vmem>>, vector<8x8xf32>
    tpu.vector_store %arg8[%c0_17, %c0_18], %19 {strides = array<i32>} : memref<8x8xf32, #tpu.memory_space<vmem>>, vector<8x8xf32>,
    return
  }
  func.func @transform_0(%arg0: i32) -> (i32, i32) {
    %c0_i32 = arith.constant 0 : i32
    %c0_i32_0 = arith.constant 0 : i32
    return %arg0, %c0_i32 : i32, i32
  }
  func.func @transform_1(%arg0: i32) -> (i32, i32) {
    %c0_i32 = arith.constant 0 : i32
    %c0_i32_0 = arith.constant 0 : i32
    %c0_i32_1 = arith.constant 0 : i32
    return %c0_i32, %c0_i32_0 : i32, i32
  }
  func.func @transform_2(%arg0: i32) -> (i32, i32) {
    %c0_i32 = arith.constant 0 : i32
    %c0_i32_0 = arith.constant 0 : i32
    %c0_i32_1 = arith.constant 0 : i32
    return %c0_i32, %c0_i32_0 : i32, i32
  }
  func.func @transform_3(%arg0: i32) -> (i32, i32) {
    %c0_i32 = arith.constant 0 : i32
    %c0_i32_0 = arith.constant 0 : i32
    %c0_i32_1 = arith.constant 0 : i32
    return %c0_i32, %c0_i32_0 : i32, i32
  }
  func.func @transform_4(%arg0: i32) -> (i32, i32) {
    %c0_i32 = arith.constant 0 : i32
    %c0_i32_0 = arith.constant 0 : i32
    %c0_i32_1 = arith.constant 0 : i32
    return %c0_i32, %c0_i32_0 : i32, i32
  }
  func.func @transform_5(%arg0: i32) -> (i32, i32) {
    %c0_i32 = arith.constant 0 : i32
    %c0_i32_0 = arith.constant 0 : i32
    %c0_i32_1 = arith.constant 0 : i32
    return %c0_i32, %c0_i32_0 : i32, i32
  }
  func.func @transform_6(%arg0: i32) -> (i32, i32) {
    %c0_i32 = arith.constant 0 : i32
    %c0_i32_0 = arith.constant 0 : i32
    %c0_i32_1 = arith.constant 0 : i32
    return %c0_i32, %c0_i32_0 : i32, i32
  }
  func.func @transform_7(%arg0: i32) -> (i32, i32) {
    %c0_i32 = arith.constant 0 : i32
    %c0_i32_0 = arith.constant 0 : i32
    return %arg0, %c0_i32 : i32, i32
  }
}

</mosaic_0001>

<llo_original>
// kernel: tpu_custom_call.1
$region0: #{tpu_custom_call.1}
  #allocation0 [shape = 'u32[]', space=smem, size = 0x4, offset = 0x4, fixed_abs, tag = 'smem constant byte address 0x4 - core index']
  #allocation1 [shape = 'u32[72,128]{1,0:T(1,128)}', space=vmem, size = 0x9000, scoped, tag = 'internal scratch']
  %s0 = inlined_call_operand.vmem [shape: f32[8,128], index: 0, kind: input, shape index: {}]
  %s1 = inlined_call_operand.vmem [shape: f32[128,128], index: 1, kind: input, shape index: {}]
  %s2 = inlined_call_operand.hbm [shape: f32[128,128], index: 2, kind: input, shape index: {}]
  %s3 = inlined_call_operand.vmem [shape: f32[1,128], index: 3, kind: input, shape index: {}]
  %s4 = inlined_call_operand.vmem [shape: f32[1,128], index: 4, kind: input, shape index: {}]
  %s5 = inlined_call_operand.vmem [shape: f32[128,8], index: 5, kind: input, shape index: {}]
  %s6 = inlined_call_operand.vmem [shape: f32[1,8], index: 6, kind: input, shape index: {}]
  %s7 = inlined_call_operand.hbm [shape: f32[8,8], index: 7, kind: output, shape index: {}]
  %s8 = sld [smem:[#allocation0]]
  $region42: #{tpu_custom_call.1} parent=0
    _
  %s10 = ssub.s32 1, %s8
  %s11 = scalar_select 0, %s10, %s8
  $region1: #{tpu_custom_call.1} parent=0
    #allocation2 [shape = 'u8[65536]{0}', space=vmem, size = 0x10000, scoped, tag = 'input window, operand 2, single buffered']
    #allocation3 [shape = 's32[1]{0}', space=sflag, size = 0x4, scoped, tag = 'scoped memory for tpu_custom_call.1']
    #allocation4 [shape = 's32[1]{0}', space=sflag, size = 0x4, scoped, tag = 'scoped memory for tpu_custom_call.1']
    #allocation5 [shape = 'u8[4096]{0}', space=vmem, size = 0x1000, scoped, tag = 'output window, operand 0, single buffered']
    %12 = vsyncpa [#allocation3], 0
    %13 = vsyncpa [#allocation4], 0
    // Predicated region
    $region2: #{tpu_custom_call.1} parent=1 // pred_check
      _
    $region3: #{tpu_custom_call.1} parent=1 // pred_check_branch
      %15 = sbr.rel (0) target = $region5
    $region4: #{tpu_custom_call.1} parent=1 // pred_region
      _
    $region5: #{tpu_custom_call.1} parent=1 // pred_fallthru
      _
    // Predicated region
    $region6: #{tpu_custom_call.1} parent=1 // pred_check
      _
    $region7: #{tpu_custom_call.1} parent=1 // pred_check_branch
      %17 = sbr.rel (0) target = $region9
    $region8: #{tpu_custom_call.1} parent=1 // pred_region
      _
    $region9: #{tpu_custom_call.1} parent=1 // pred_fallthru
      _
    // Predicated region
    $region10: #{tpu_custom_call.1} parent=1 // pred_check
      _
    $region11: #{tpu_custom_call.1} parent=1 // pred_check_branch
      %19 = sbr.rel (0) target = $region13
    $region12: #{tpu_custom_call.1} parent=1 // pred_region
      %21 = vsyncadd [#allocation3], 0
      %s22 = sshll.u32 %s2, 4
      %s23 = int_to_ptr.hbm [resolvable:$true] %s22
      %s24 = sshll.u32 [#allocation2], 4
      %s25 = int_to_ptr.vmem [resolvable:$true] %s24
      %30 = dma.hbm_to_vmem [thread:$0]  %s23, 2048, %s25, [#allocation3], 128, 128, 8
    $region13: #{tpu_custom_call.1} parent=1 // pred_fallthru
      _
    // Predicated region
    $region14: #{tpu_custom_call.1} parent=1 // pred_check
      _
    $region15: #{tpu_custom_call.1} parent=1 // pred_check_branch
      %32 = sbr.rel (0) target = $region17
    $region16: #{tpu_custom_call.1} parent=1 // pred_region
      _
    $region17: #{tpu_custom_call.1} parent=1 // pred_fallthru
      _
    // Predicated region
    $region18: #{tpu_custom_call.1} parent=1 // pred_check
      _
    $region19: #{tpu_custom_call.1} parent=1 // pred_check_branch
      %34 = sbr.rel (0) target = $region21
    $region20: #{tpu_custom_call.1} parent=1 // pred_region
      _
    $region21: #{tpu_custom_call.1} parent=1 // pred_fallthru
      _
    // Predicated region
    $region22: #{tpu_custom_call.1} parent=1 // pred_check
      _
    $region23: #{tpu_custom_call.1} parent=1 // pred_check_branch
      %36 = sbr.rel (0) target = $region25
    $region24: #{tpu_custom_call.1} parent=1 // pred_region
      _
    $region25: #{tpu_custom_call.1} parent=1 // pred_fallthru
      _
    // Predicated region
    $region26: #{tpu_custom_call.1} parent=1 // pred_check
      _
    $region27: #{tpu_custom_call.1} parent=1 // pred_check_branch
      %38 = sbr.rel (0) target = $region29
    $region28: #{tpu_custom_call.1} parent=1 // pred_region
      _
    $region29: #{tpu_custom_call.1} parent=1 // pred_fallthru
      _
    // Predicated region
    $region30: #{tpu_custom_call.1} parent=1 // pred_check
      _
    $region31: #{tpu_custom_call.1} parent=1 // pred_check_branch
      %40 = sbr.rel (0) target = $region33
    $region32: #{tpu_custom_call.1} parent=1 // pred_region
      %42 = dma.done [#allocation3], 2048
    $region33: #{tpu_custom_call.1} parent=1 // pred_fallthru
      _
    %v43 = vld [vmem:[%s0] sm:$0xff]
    %v44 = vld [vmem:[%s1] sm:$0xff]
    %v45 = vld [vmem:[%s1 + $0x8] sm:$0xff]
    %v46 = vld [vmem:[%s1 + $0x10] sm:$0xff]
    %v47 = vld [vmem:[%s1 + $0x18] sm:$0xff]
    %v48 = vld [vmem:[%s1 + $0x20] sm:$0xff]
    %v49 = vld [vmem:[%s1 + $0x28] sm:$0xff]
    %v50 = vld [vmem:[%s1 + $0x30] sm:$0xff]
    %v51 = vld [vmem:[%s1 + $0x38] sm:$0xff]
    %v52 = vld [vmem:[%s1 + $0x40] sm:$0xff]
    %v53 = vld [vmem:[%s1 + $0x48] sm:$0xff]
    %v54 = vld [vmem:[%s1 + $0x50] sm:$0xff]
    %v55 = vld [vmem:[%s1 + $0x58] sm:$0xff]
    %v56 = vld [vmem:[%s1 + $0x60] sm:$0xff]
    %v57 = vld [vmem:[%s1 + $0x68] sm:$0xff]
    %v58 = vld [vmem:[%s1 + $0x70] sm:$0xff]
    %v59 = vld [vmem:[%s1 + $0x78] sm:$0xff]
    %v60 = vld [vmem:[%s3] sm:$0x1]
    %v62 = vperm.slane %v60, 0
    %64 = vmatpush.msra.mxu0 %v59
    %65 = vmatpush.msra.mxu0 %v58
    %66 = vmatpush.msra.mxu0 %v57
    %67 = vmatpush.msra.mxu0 %v56
    %68 = vmatpush.msra.mxu0 %v55
    %69 = vmatpush.msra.mxu0 %v54
    %70 = vmatpush.msra.mxu0 %v53
    %71 = vmatpush.msra.mxu0 %v52
    %72 = vmatpush.msra.mxu0 %v51
    %73 = vmatpush.msra.mxu0 %v50
    %74 = vmatpush.msra.mxu0 %v49
    %75 = vmatpush.msra.mxu0 %v48
    %76 = vmatpush.msra.mxu0 %v47
    %77 = vmatpush.msra.mxu0 %v46
    %78 = vmatpush.msra.mxu0 %v45
    %79 = vmatpush.msra.mxu0 %v44
    %80 = vmatmul.f32.gmra.mxu0 %v43
    %v81 = vpop.f32.mrf.mxu0
    %v82 = vadd.f32 %v62, %v81
    %83 = vdwg.mxu0
    %v84 = vmax.f32 %v82, 0.0
    %v85 = vld [vmem:[#allocation2] sm:$0xff]
    %v86 = vld [vmem:[#allocation2 + $0x8] sm:$0xff]
    %v87 = vld [vmem:[#allocation2 + $0x10] sm:$0xff]
    %v88 = vld [vmem:[#allocation2 + $0x18] sm:$0xff]
    %v89 = vld [vmem:[#allocation2 + $0x20] sm:$0xff]
    %v90 = vld [vmem:[#allocation2 + $0x28] sm:$0xff]
    %v91 = vld [vmem:[#allocation2 + $0x30] sm:$0xff]
    %v92 = vld [vmem:[#allocation2 + $0x38] sm:$0xff]
    %v93 = vld [vmem:[#allocation2 + $0x40] sm:$0xff]
    %v94 = vld [vmem:[#allocation2 + $0x48] sm:$0xff]
    %v95 = vld [vmem:[#allocation2 + $0x50] sm:$0xff]
    %v96 = vld [vmem:[#allocation2 + $0x58] sm:$0xff]
    %v97 = vld [vmem:[#allocation2 + $0x60] sm:$0xff]
    %v98 = vld [vmem:[#allocation2 + $0x68] sm:$0xff]
    %v99 = vld [vmem:[#allocation2 + $0x70] sm:$0xff]
    %v100 = vld [vmem:[#allocation2 + $0x78] sm:$0xff]
    %v101 = vld [vmem:[%s4] sm:$0x1]
    %v103 = vperm.slane %v101, 0
    %105 = vmatpush.msra.mxu0 %v100
    %106 = vmatpush.msra.mxu0 %v99
    %107 = vmatpush.msra.mxu0 %v98
    %108 = vmatpush.msra.mxu0 %v97
    %109 = vmatpush.msra.mxu0 %v96
    %110 = vmatpush.msra.mxu0 %v95
    %111 = vmatpush.msra.mxu0 %v94
    %112 = vmatpush.msra.mxu0 %v93
    %113 = vmatpush.msra.mxu0 %v92
    %114 = vmatpush.msra.mxu0 %v91
    %115 = vmatpush.msra.mxu0 %v90
    %116 = vmatpush.msra.mxu0 %v89
    %117 = vmatpush.msra.mxu0 %v88
    %118 = vmatpush.msra.mxu0 %v87
    %119 = vmatpush.msra.mxu0 %v86
    %120 = vmatpush.msra.mxu0 %v85
    %121 = vmatmul.f32.gmra.mxu0 %v84
    %v122 = vpop.f32.mrf.mxu0
    %v123 = vadd.f32 %v103, %v122
    %124 = vdwg.mxu0
    %v125 = vmax.f32 %v123, 0.0
    %v126 = vld [vmem:[%s5] sm:$0xff]
    %v127 = vld [vmem:[%s5 + $0x8] sm:$0xff]
    %v128 = vld [vmem:[%s5 + $0x10] sm:$0xff]
    %v129 = vld [vmem:[%s5 + $0x18] sm:$0xff]
    %v130 = vld [vmem:[%s5 + $0x20] sm:$0xff]
    %v131 = vld [vmem:[%s5 + $0x28] sm:$0xff]
    %v132 = vld [vmem:[%s5 + $0x30] sm:$0xff]
    %v133 = vld [vmem:[%s5 + $0x38] sm:$0xff]
    %v134 = vld [vmem:[%s5 + $0x40] sm:$0xff]
    %v135 = vld [vmem:[%s5 + $0x48] sm:$0xff]
    %v136 = vld [vmem:[%s5 + $0x50] sm:$0xff]
    %v137 = vld [vmem:[%s5 + $0x58] sm:$0xff]
    %v138 = vld [vmem:[%s5 + $0x60] sm:$0xff]
    %v139 = vld [vmem:[%s5 + $0x68] sm:$0xff]
    %v140 = vld [vmem:[%s5 + $0x70] sm:$0xff]
    %v141 = vld [vmem:[%s5 + $0x78] sm:$0xff]
    %v142 = vld [vmem:[%s6] sm:$0x1]
    %v144 = vperm.slane %v142, 0
    %146 = vmatpush.msra.mxu0 %v141
    %147 = vmatpush.msra.mxu0 %v140
    %148 = vmatpush.msra.mxu0 %v139
    %149 = vmatpush.msra.mxu0 %v138
    %150 = vmatpush.msra.mxu0 %v137
    %151 = vmatpush.msra.mxu0 %v136
    %152 = vmatpush.msra.mxu0 %v135
    %153 = vmatpush.msra.mxu0 %v134
    %154 = vmatpush.msra.mxu0 %v133
    %155 = vmatpush.msra.mxu0 %v132
    %156 = vmatpush.msra.mxu0 %v131
    %157 = vmatpush.msra.mxu0 %v130
    %158 = vmatpush.msra.mxu0 %v129
    %159 = vmatpush.msra.mxu0 %v128
    %160 = vmatpush.msra.mxu0 %v127
    %161 = vmatpush.msra.mxu0 %v126
    %162 = vmatmul.f32.gmra.mxu0 %v125
    %v163 = vpop.f32.mrf.mxu0
    %v164 = vadd.f32 %v144, %v163
    %165 = vdwg.mxu0
    %vm166 = vcmask 64512
    %167 = vst.msk [vmem:[#allocation5] sm:$0xff] %vm166, %v164
    // Predicated region
    $region34: #{tpu_custom_call.1} parent=1 // pred_check
      _
    $region35: #{tpu_custom_call.1} parent=1 // pred_check_branch
      %169 = sbr.rel (0) target = $region37
    $region36: #{tpu_custom_call.1} parent=1 // pred_region
      %171 = vsyncadd [#allocation4], 0
      %s173 = sshll.u32 [#allocation5], 4
      %s174 = int_to_ptr.vmem [resolvable:$true] %s173
      %s175 = sshll.u32 %s7, 4
      %s176 = int_to_ptr.hbm [resolvable:$true] %s175
      %178 = dma.vmem_to_hbm [thread:$0]  %s174, 128, %s176, [#allocation4]
    $region37: #{tpu_custom_call.1} parent=1 // pred_fallthru
      _
    // Predicated region
    $region38: #{tpu_custom_call.1} parent=1 // pred_check
      _
    $region39: #{tpu_custom_call.1} parent=1 // pred_check_branch
      %180 = sbr.rel (0) target = $region41
    $region40: #{tpu_custom_call.1} parent=1 // pred_region
      %182 = dma.done [#allocation4], 128
    $region41: #{tpu_custom_call.1} parent=1 // pred_fallthru
      _
    %183 = vsyncpa [#allocation3], 1
    %184 = vsyncpa [#allocation4], 1

// kernel: tpu_custom_call.1
$region0: #{tpu_custom_call.1}
  #allocation0 [shape = 'u32[]', space=smem, size = 0x4, offset = 0x4, fixed_abs, tag = 'smem constant byte address 0x4 - core index']
  #allocation1 [shape = 'u32[72,128]{1,0:T(1,128)}', space=vmem, size = 0x9000, scoped, tag = 'internal scratch']
  %s0 = inlined_call_operand.vmem [shape: f32[8,128], index: 0, kind: input, shape index: {}]
  %s1 = inlined_call_operand.vmem [shape: f32[128,128], index: 1, kind: input, shape index: {}]
  %s2 = inlined_call_operand.hbm [shape: f32[128,128], index: 2, kind: input, shape index: {}]
  %s3 = inlined_call_operand.vmem [shape: f32[1,128], index: 3, kind: input, shape index: {}]
  %s4 = inlined_call_operand.vmem [shape: f32[1,128], index: 4, kind: input, shape index: {}]
  %s5 = inlined_call_operand.vmem [shape: f32[128,8], index: 5, kind: input, shape index: {}]
  %s6 = inlined_call_operand.vmem [shape: f32[1,8], index: 6, kind: input, shape index: {}]
  %s7 = inlined_call_operand.hbm [shape: f32[8,8], index: 7, kind: output, shape index: {}]
  %s8 = sld [smem:[#allocation0]]
  $region42: #{tpu_custom_call.1} parent=0
    _
  %s10 = ssub.s32 1, %s8
  %s11 = scalar_select 0, %s10, %s8
  $region1: #{tpu_custom_call.1} parent=0
    #allocation2 [shape = 'u8[65536]{0}', space=vmem, size = 0x10000, scoped, tag = 'input window, operand 2, single buffered']
    #allocation3 [shape = 's32[1]{0}', space=sflag, size = 0x4, scoped, tag = 'scoped memory for tpu_custom_call.1']
    #allocation4 [shape = 's32[1]{0}', space=sflag, size = 0x4, scoped, tag = 'scoped memory for tpu_custom_call.1']
    #allocation5 [shape = 'u8[4096]{0}', space=vmem, size = 0x1000, scoped, tag = 'output window, operand 0, single buffered']
    %12 = vsyncpa [#allocation3], 0
    %13 = vsyncpa [#allocation4], 0
    // Predicated region
    $region2: #{tpu_custom_call.1} parent=1 // pred_check
      _
    $region3: #{tpu_custom_call.1} parent=1 // pred_check_branch
      %15 = sbr.rel (0) target = $region5
    $region4: #{tpu_custom_call.1} parent=1 // pred_region
      _
    $region5: #{tpu_custom_call.1} parent=1 // pred_fallthru
      _
    // Predicated region
    $region6: #{tpu_custom_call.1} parent=1 // pred_check
      _
    $region7: #{tpu_custom_call.1} parent=1 // pred_check_branch
      %17 = sbr.rel (0) target = $region9
    $region8: #{tpu_custom_call.1} parent=1 // pred_region
      _
    $region9: #{tpu_custom_call.1} parent=1 // pred_fallthru
      _
    // Predicated region
    $region10: #{tpu_custom_call.1} parent=1 // pred_check
      _
    $region11: #{tpu_custom_call.1} parent=1 // pred_check_branch
      %19 = sbr.rel (0) target = $region13
    $region12: #{tpu_custom_call.1} parent=1 // pred_region
      %21 = vsyncadd [#allocation3], 0
      %s22 = sshll.u32 %s2, 4
      %s23 = int_to_ptr.hbm [resolvable:$true] %s22
      %s24 = sshll.u32 [#allocation2], 4
      %s25 = int_to_ptr.vmem [resolvable:$true] %s24
      %30 = dma.hbm_to_vmem [thread:$0]  %s23, 2048, %s25, [#allocation3], 128, 128, 8
    $region13: #{tpu_custom_call.1} parent=1 // pred_fallthru
      _
    // Predicated region
    $region14: #{tpu_custom_call.1} parent=1 // pred_check
      _
    $region15: #{tpu_custom_call.1} parent=1 // pred_check_branch
      %32 = sbr.rel (0) target = $region17
    $region16: #{tpu_custom_call.1} parent=1 // pred_region
      _
    $region17: #{tpu_custom_call.1} parent=1 // pred_fallthru
      _
    // Predicated region
    $region18: #{tpu_custom_call.1} parent=1 // pred_check
      _
    $region19: #{tpu_custom_call.1} parent=1 // pred_check_branch
      %34 = sbr.rel (0) target = $region21
    $region20: #{tpu_custom_call.1} parent=1 // pred_region
      _
    $region21: #{tpu_custom_call.1} parent=1 // pred_fallthru
      _
    // Predicated region
    $region22: #{tpu_custom_call.1} parent=1 // pred_check
      _
    $region23: #{tpu_custom_call.1} parent=1 // pred_check_branch
      %36 = sbr.rel (0) target = $region25
    $region24: #{tpu_custom_call.1} parent=1 // pred_region
      _
    $region25: #{tpu_custom_call.1} parent=1 // pred_fallthru
      _
    // Predicated region
    $region26: #{tpu_custom_call.1} parent=1 // pred_check
      _
    $region27: #{tpu_custom_call.1} parent=1 // pred_check_branch
      %38 = sbr.rel (0) target = $region29
    $region28: #{tpu_custom_call.1} parent=1 // pred_region
      _
    $region29: #{tpu_custom_call.1} parent=1 // pred_fallthru
      _
    // Predicated region
    $region30: #{tpu_custom_call.1} parent=1 // pred_check
      _
    $region31: #{tpu_custom_call.1} parent=1 // pred_check_branch
      %40 = sbr.rel (0) target = $region33
    $region32: #{tpu_custom_call.1} parent=1 // pred_region
      %42 = dma.done [#allocation3], 2048
    $region33: #{tpu_custom_call.1} parent=1 // pred_fallthru
      _
    %v43 = vld [vmem:[%s0] sm:$0xff]
    %v44 = vld [vmem:[%s1] sm:$0xff]
    %v45 = vld [vmem:[%s1 + $0x8] sm:$0xff]
    %v46 = vld [vmem:[%s1 + $0x10] sm:$0xff]
    %v47 = vld [vmem:[%s1 + $0x18] sm:$0xff]
    %v48 = vld [vmem:[%s1 + $0x20] sm:$0xff]
    %v49 = vld [vmem:[%s1 + $0x28] sm:$0xff]
    %v50 = vld [vmem:[%s1 + $0x30] sm:$0xff]
    %v51 = vld [vmem:[%s1 + $0x38] sm:$0xff]
    %v52 = vld [vmem:[%s1 + $0x40] sm:$0xff]
    %v53 = vld [vmem:[%s1 + $0x48] sm:$0xff]
    %v54 = vld [vmem:[%s1 + $0x50] sm:$0xff]
    %v55 = vld [vmem:[%s1 + $0x58] sm:$0xff]
    %v56 = vld [vmem:[%s1 + $0x60] sm:$0xff]
    %v57 = vld [vmem:[%s1 + $0x68] sm:$0xff]
    %v58 = vld [vmem:[%s1 + $0x70] sm:$0xff]
    %v59 = vld [vmem:[%s1 + $0x78] sm:$0xff]
    %v60 = vld [vmem:[%s3] sm:$0x1]
    %v62 = vperm.slane %v60, 0
    %64 = vmatpush.msra.mxu0 %v59
    %65 = vmatpush.msra.mxu0 %v58
    %66 = vmatpush.msra.mxu0 %v57
    %67 = vmatpush.msra.mxu0 %v56
    %68 = vmatpush.msra.mxu0 %v55
    %69 = vmatpush.msra.mxu0 %v54
    %70 = vmatpush.msra.mxu0 %v53
    %71 = vmatpush.msra.mxu0 %v52
    %72 = vmatpush.msra.mxu0 %v51
    %73 = vmatpush.msra.mxu0 %v50
    %74 = vmatpush.msra.mxu0 %v49
    %75 = vmatpush.msra.mxu0 %v48
    %76 = vmatpush.msra.mxu0 %v47
    %77 = vmatpush.msra.mxu0 %v46
    %78 = vmatpush.msra.mxu0 %v45
    %79 = vmatpush.msra.mxu0 %v44
    %80 = vmatmul.f32.gmra.mxu0 %v43
    %v81 = vpop.f32.mrf.mxu0
    %v82 = vadd.f32 %v62, %v81
    %83 = vdwg.mxu0
    %v84 = vmax.f32 %v82, 0.0
    %v85 = vld [vmem:[#allocation2] sm:$0xff]
    %v86 = vld [vmem:[#allocation2 + $0x8] sm:$0xff]
    %v87 = vld [vmem:[#allocation2 + $0x10] sm:$0xff]
    %v88 = vld [vmem:[#allocation2 + $0x18] sm:$0xff]
    %v89 = vld [vmem:[#allocation2 + $0x20] sm:$0xff]
    %v90 = vld [vmem:[#allocation2 + $0x28] sm:$0xff]
    %v91 = vld [vmem:[#allocation2 + $0x30] sm:$0xff]
    %v92 = vld [vmem:[#allocation2 + $0x38] sm:$0xff]
    %v93 = vld [vmem:[#allocation2 + $0x40] sm:$0xff]
    %v94 = vld [vmem:[#allocation2 + $0x48] sm:$0xff]
    %v95 = vld [vmem:[#allocation2 + $0x50] sm:$0xff]
    %v96 = vld [vmem:[#allocation2 + $0x58] sm:$0xff]
    %v97 = vld [vmem:[#allocation2 + $0x60] sm:$0xff]
    %v98 = vld [vmem:[#allocation2 + $0x68] sm:$0xff]
    %v99 = vld [vmem:[#allocation2 + $0x70] sm:$0xff]
    %v100 = vld [vmem:[#allocation2 + $0x78] sm:$0xff]
    %v101 = vld [vmem:[%s4] sm:$0x1]
    %v103 = vperm.slane %v101, 0
    %105 = vmatpush.msra.mxu0 %v100
    %106 = vmatpush.msra.mxu0 %v99
    %107 = vmatpush.msra.mxu0 %v98
    %108 = vmatpush.msra.mxu0 %v97
    %109 = vmatpush.msra.mxu0 %v96
    %110 = vmatpush.msra.mxu0 %v95
    %111 = vmatpush.msra.mxu0 %v94
    %112 = vmatpush.msra.mxu0 %v93
    %113 = vmatpush.msra.mxu0 %v92
    %114 = vmatpush.msra.mxu0 %v91
    %115 = vmatpush.msra.mxu0 %v90
    %116 = vmatpush.msra.mxu0 %v89
    %117 = vmatpush.msra.mxu0 %v88
    %118 = vmatpush.msra.mxu0 %v87
    %119 = vmatpush.msra.mxu0 %v86
    %120 = vmatpush.msra.mxu0 %v85
    %121 = vmatmul.f32.gmra.mxu0 %v84
    %v122 = vpop.f32.mrf.mxu0
    %v123 = vadd.f32 %v103, %v122
    %124 = vdwg.mxu0
    %v125 = vmax.f32 %v123, 0.0
    %v126 = vld [vmem:[%s5] sm:$0xff]
    %v127 = vld [vmem:[%s5 + $0x8] sm:$0xff]
    %v128 = vld [vmem:[%s5 + $0x10] sm:$0xff]
    %v129 = vld [vmem:[%s5 + $0x18] sm:$0xff]
    %v130 = vld [vmem:[%s5 + $0x20] sm:$0xff]
    %v131 = vld [vmem:[%s5 + $0x28] sm:$0xff]
    %v132 = vld [vmem:[%s5 + $0x30] sm:$0xff]
    %v133 = vld [vmem:[%s5 + $0x38] sm:$0xff]
    %v134 = vld [vmem:[%s5 + $0x40] sm:$0xff]
    %v135 = vld [vmem:[%s5 + $0x48] sm:$0xff]
    %v136 = vld [vmem:[%s5 + $0x50] sm:$0xff]
    %v137 = vld [vmem:[%s5 + $0x58] sm:$0xff]
    %v138 = vld [vmem:[%s5 + $0x60] sm:$0xff]
    %v139 = vld [vmem:[%s5 + $0x68] sm:$0xff]
    %v140 = vld [vmem:[%s5 + $0x70] sm:$0xff]
    %v141 = vld [vmem:[%s5 + $0x78] sm:$0xff]
    %v142 = vld [vmem:[%s6] sm:$0x1]
    %v144 = vperm.slane %v142, 0
    %146 = vmatpush.msra.mxu0 %v141
    %147 = vmatpush.msra.mxu0 %v140
    %148 = vmatpush.msra.mxu0 %v139
    %149 = vmatpush.msra.mxu0 %v138
    %150 = vmatpush.msra.mxu0 %v137
    %151 = vmatpush.msra.mxu0 %v136
    %152 = vmatpush.msra.mxu0 %v135
    %153 = vmatpush.msra.mxu0 %v134
    %154 = vmatpush.msra.mxu0 %v133
    %155 = vmatpush.msra.mxu0 %v132
    %156 = vmatpush.msra.mxu0 %v131
    %157 = vmatpush.msra.mxu0 %v130
    %158 = vmatpush.msra.mxu0 %v129
    %159 = vmatpush.msra.mxu0 %v128
    %160 = vmatpush.msra.mxu0 %v127
    %161 = vmatpush.msra.mxu0 %v126
    %162 = vmatmul.f32.gmra.mxu0 %v125
    %v163 = vpop.f32.mrf.mxu0
    %v164 = vadd.f32 %v144, %v163
    %165 = vdwg.mxu0
    %vm166 = vcmask 64512
    %167 = vst.msk [vmem:[#allocation5] sm:$0xff] %vm166, %v164
    // Predicated region
    $region34: #{tpu_custom_call.1} parent=1 // pred_check
      _
    $region35: #{tpu_custom_call.1} parent=1 // pred_check_branch
      %169 = sbr.rel (0) target = $region37
    $region36: #{tpu_custom_call.1} parent=1 // pred_region
      %171 = vsyncadd [#allocation4], 0
      %s173 = sshll.u32 [#allocation5], 4
      %s174 = int_to_ptr.vmem [resolvable:$true] %s173
      %s175 = sshll.u32 %s7, 4
      %s176 = int_to_ptr.hbm [resolvable:$true] %s175
      %178 = dma.vmem_to_hbm [thread:$0]  %s174, 128, %s176, [#allocation4]
    $region37: #{tpu_custom_call.1} parent=1 // pred_fallthru
      _
    // Predicated region
    $region38: #{tpu_custom_call.1} parent=1 // pred_check
      _
    $region39: #{tpu_custom_call.1} parent=1 // pred_check_branch
      %180 = sbr.rel (0) target = $region41
    $region40: #{tpu_custom_call.1} parent=1 // pred_region
      %182 = dma.done [#allocation4], 128
    $region41: #{tpu_custom_call.1} parent=1 // pred_fallthru
      _
    %183 = vsyncpa [#allocation3], 1
    %184 = vsyncpa [#allocation4], 1

</llo_original>
